<compile_context>
chip_gen: v6e
topology: v6e:2x2x1
jax: 0.10.0
libtpu: 0.0.40
codegen_flags: <defaults>
</compile_context>

<pallas_src>
import jax
import jax.numpy as jnp
from jax.experimental import pallas as pl
from jax.experimental.pallas import tpu as pltpu


def _round_up(x, m):
    return (x + m - 1) // m * m


def gcn_kernel(x_ref, adj_ref, w_ref, b_ref, o_ref, acc_ref):
    k = pl.program_id(1)

    @pl.when(k == 0)
    def _():
        acc_ref[...] = jnp.zeros_like(acc_ref)

    # support tile for this column-block of adj: (TK, F_out)
    support = jnp.dot(x_ref[...], w_ref[...], preferred_element_type=jnp.float32)
    # accumulate this row-block's partial product: (TM, TK) @ (TK, F_out)
    acc_ref[...] += jnp.dot(adj_ref[...], support, preferred_element_type=jnp.float32)

    @pl.when(k == pl.num_programs(1) - 1)
    def _():
        o_ref[...] = (acc_ref[...] + b_ref[...]).astype(o_ref.dtype)


def gcn_layer(x, adj, weight, bias, *, use_bf16_inputs=False):
    """Fused GCN layer: adj @ (x @ weight) + bias, tiled over rows and the
    adjacency reduction with a VMEM accumulator.

    Set use_bf16_inputs=True to halve HBM traffic / unlock full MXU rate on
    v6e/v7x (accumulation stays f32; slightly looser numerics).
    """
    N, f_in = x.shape
    f_out = weight.shape[1]

    # --- Padded, lane-dense shapes --------------------------------------
    f_in_p = _round_up(f_in, 128)
    f_out_p = _round_up(f_out, 128)

    n_aligned = _round_up(N, 128)
    if n_aligned <= 512:
        tm = tk = n_aligned              # single tile along each N axis
    else:
        tm, tk = 256, 512                # mid-size tiles; fit 32 MiB scoped VMEM
    n_pad = _round_up(N, tk)             # tm divides tk in both branches
    assert n_pad % tm == 0 and n_pad % tk == 0

    in_dtype = jnp.bfloat16 if use_bf16_inputs else jnp.float32

    x_p = jnp.pad(x, ((0, n_pad - N), (0, f_in_p - f_in))).astype(in_dtype)
    adj_p = jnp.pad(adj, ((0, n_pad - N), (0, n_pad - N))).astype(in_dtype)
    w_p = jnp.pad(weight, ((0, f_in_p - f_in), (0, f_out_p - f_out))).astype(in_dtype)
    b_p = jnp.pad(bias.reshape(1, -1).astype(jnp.float32),
                  ((0, 0), (0, f_out_p - f_out)))

    grid = (n_pad // tm, n_pad // tk)

    out_padded = pl.pallas_call(
        gcn_kernel,
        out_shape=jax.ShapeDtypeStruct((n_pad, f_out_p), jnp.float32),
        grid_spec=pltpu.PrefetchScalarGridSpec(
            num_scalar_prefetch=0,
            grid=grid,
            in_specs=[
                # x: column-block k of the reduction, all (padded) features
                pl.BlockSpec((tk, f_in_p), lambda i, k: (k, 0)),
                # adj: (row-block i, column-block k)
                pl.BlockSpec((tm, tk), lambda i, k: (i, k)),
                # weight / bias: resident full-extent
                pl.BlockSpec((f_in_p, f_out_p), lambda i, k: (0, 0)),
                pl.BlockSpec((1, f_out_p), lambda i, k: (0, 0)),
            ],
            # output indexed by i only across k -> accumulator-resident block
            out_specs=pl.BlockSpec((tm, f_out_p), lambda i, k: (i, 0)),
            scratch_shapes=[pltpu.VMEM((tm, f_out_p), jnp.float32)],
        ),
        compiler_params=pltpu.CompilerParams(
            dimension_semantics=("parallel", "arbitrary"),
        ),
    )(x_p, adj_p, w_p, b_p)

    return out_padded[:N, :f_out]


def xavier_normal(key, shape):
    """Matches torch.nn.init.xavier_normal_ for a 2-D (fan_in, fan_out) matrix."""
    fan_in, fan_out = shape
    std = (2.0 / (fan_in + fan_out)) ** 0.5
    return std * jax.random.normal(key, shape, dtype=jnp.float32)


def _make_inputs(key, n, f_in, f_out):
    k_x, k_adj, k_w = jax.random.split(key, 3)
    x = jax.random.normal(k_x, (n, f_in), dtype=jnp.float32)
    # Symmetric-normalized dense adjacency (typical GCN preprocessing).
    a = (jax.random.uniform(k_adj, (n, n)) > 0.6).astype(jnp.float32)
    a = jnp.maximum(a, a.T) + jnp.eye(n, dtype=jnp.float32)
    deg = jnp.sum(a, axis=1)
    d_inv_sqrt = 1.0 / jnp.sqrt(deg)
    adj = a * d_inv_sqrt[:, None] * d_inv_sqrt[None, :]
    weight = xavier_normal(k_w, (f_in, f_out))
    bias = jnp.zeros((f_out,), dtype=jnp.float32)
    return x, adj, weight, bias


if __name__ == "__main__":
    key = jax.random.PRNGKey(0)
    k1, k2 = jax.random.split(key)

    # Small deterministic example: N=8 nodes, in_channels=16, out_channels=32.
    x, adj, weight, bias = _make_inputs(k1, 8, 16, 32)
    out = gcn_layer(x, adj, weight, bias)
    jax.block_until_ready(out)
    ref = adj @ (x @ weight) + bias
    assert out.shape == (8, 32)
    assert jnp.allclose(out, ref, atol=1e-5, rtol=1e-5)

    # Non-aligned, multi-tile case to exercise padding + the tiled reduction.
    x2, adj2, weight2, bias2 = _make_inputs(k2, 600, 48, 72)
    out2 = gcn_layer(x2, adj2, weight2, bias2)
    jax.block_until_ready(out2)
    ref2 = adj2 @ (x2 @ weight2) + bias2
    assert out2.shape == (600, 72)
    assert jnp.allclose(out2, ref2, atol=1e-4, rtol=1e-4)

    print("KERNEL_OK")
</pallas_src>

<mosaic_0001>
module attributes {stable_mosaic.version = 11 : i64} {
  func.func @gcn_kernel(%arg0: i32, %arg1: i32, %arg2: memref<128x128xf32, #tpu.memory_space<vmem>>, %arg3: memref<128x128xf32, #tpu.memory_space<vmem>>, %arg4: memref<128x128xf32, #tpu.memory_space<vmem>>, %arg5: memref<1x128xf32, #tpu.memory_space<vmem>>, %arg6: memref<128x128xf32, #tpu.memory_space<vmem>>, %arg7: memref<128x128xf32, #tpu.memory_space<vmem>>) attributes {dimension_semantics = [#tpu.dimension_semantics<parallel>, #tpu.dimension_semantics<arbitrary>], iteration_bounds = array<i64: 1, 1>, scalar_prefetch = 0 : i64, scratch_operands = 1 : i64, tpu.core_type = #tpu.core_type<tc>, window_params = [{transform_indices = @transform_0, window_bounds = array<i64: 128, 128>}, {transform_indices = @transform_1, window_bounds = array<i64: 128, 128>}, {pipeline_mode = #tpu.pipeline_mode<synchronous>, transform_indices = @transform_2, window_bounds = array<i64: 128, 128>}, {pipeline_mode = #tpu.pipeline_mode<synchronous>, transform_indices = @transform_3, window_bounds = array<i64: 1, 128>}, {transform_indices = @transform_4, window_bounds = array<i64: 128, 128>}]} {
    %c0_i32 = arith.constant 0 : i32
    %0 = arith.cmpi eq, %arg1, %c0_i32 : i32
    %1 = arith.extui %0 : i1 to i32
    %c0_i32_0 = arith.constant 0 : i32
    %2 = arith.cmpi ne, %1, %c0_i32_0 : i32
    scf.if %2 {
      %cst_13 = arith.constant 0.000000e+00 : f32
      %14 = vector.broadcast %cst_13 : f32 to vector<128x128xf32>
      %c0_14 = arith.constant 0 : index
      %c0_15 = arith.constant 0 : index
      %15 = vector.load %arg7[%c0_14, %c0_15] : memref<128x128xf32, #tpu.memory_space<vmem>>, vector<128x128xf32>
      tpu.vector_store %arg7[%c0_14, %c0_15], %14 {strides = array<i32>} : memref<128x128xf32, #tpu.memory_space<vmem>>, vector<128x128xf32>,
    } else {
    }
    %c0 = arith.constant 0 : index
    %c0_1 = arith.constant 0 : index
    %3 = vector.load %arg2[%c0, %c0_1] : memref<128x128xf32, #tpu.memory_space<vmem>>, vector<128x128xf32>
    %c0_2 = arith.constant 0 : index
    %c0_3 = arith.constant 0 : index
    %4 = vector.load %arg4[%c0_2, %c0_3] : memref<128x128xf32, #tpu.memory_space<vmem>>, vector<128x128xf32>
    %cst = arith.constant dense<0.000000e+00> : vector<128x128xf32>
    %5 = tpu.matmul %3, %4, %cst {dimension_numbers = #tpu.dot_dimension_numbers<[1], [0], [0], [1], [0, 0, 1, 1], [], []>} : vector<128x128xf32>, vector<128x128xf32>, vector<128x128xf32> -> vector<128x128xf32>
    %c0_4 = arith.constant 0 : index
    %c0_5 = arith.constant 0 : index
    %6 = vector.load %arg7[%c0_4, %c0_5] : memref<128x128xf32, #tpu.memory_space<vmem>>, vector<128x128xf32>
    %c0_6 = arith.constant 0 : index
    %c0_7 = arith.constant 0 : index
    %7 = vector.load %arg3[%c0_6, %c0_7] : memref<128x128xf32, #tpu.memory_space<vmem>>, vector<128x128xf32>
    %cst_8 = arith.constant dense<0.000000e+00> : vector<128x128xf32>
    %8 = tpu.matmul %7, %5, %cst_8 {dimension_numbers = #tpu.dot_dimension_numbers<[1], [0], [0], [1], [0, 0, 1, 1], [], []>} : vector<128x128xf32>, vector<128x128xf32>, vector<128x128xf32> -> vector<128x128xf32>
    %9 = arith.addf %6, %8 : vector<128x128xf32>
    %c0_9 = arith.constant 0 : index
    %c0_10 = arith.constant 0 : index
    %10 = vector.load %arg7[%c0_9, %c0_10] : memref<128x128xf32, #tpu.memory_space<vmem>>, vector<128x128xf32>
    tpu.vector_store %arg7[%c0_9, %c0_10], %9 {strides = array<i32>} : memref<128x128xf32, #tpu.memory_space<vmem>>, vector<128x128xf32>,
    %c0_i32_11 = arith.constant 0 : i32
    %11 = arith.cmpi eq, %arg1, %c0_i32_11 : i32
    %12 = arith.extui %11 : i1 to i32
    %c0_i32_12 = arith.constant 0 : i32
    %13 = arith.cmpi ne, %12, %c0_i32_12 : i32
    scf.if %13 {
      %c0_13 = arith.constant 0 : index
      %c0_14 = arith.constant 0 : index
      %14 = vector.load %arg7[%c0_13, %c0_14] : memref<128x128xf32, #tpu.memory_space<vmem>>, vector<128x128xf32>
      %c0_15 = arith.constant 0 : index
      %c0_16 = arith.constant 0 : index
      %15 = vector.load %arg5[%c0_15, %c0_16] : memref<1x128xf32, #tpu.memory_space<vmem>>, vector<1x128xf32>
      %16 = vector.broadcast %15 : vector<1x128xf32> to vector<128x128xf32>
      %17 = arith.addf %14, %16 : vector<128x128xf32>
      %c0_17 = arith.constant 0 : index
      %c0_18 = arith.constant 0 : index
      %18 = vector.load %arg6[%c0_17, %c0_18] : memref<128x128xf32, #tpu.memory_space<vmem>>, vector<128x128xf32>
      tpu.vector_store %arg6[%c0_17, %c0_18], %17 {strides = array<i32>} : memref<128x128xf32, #tpu.memory_space<vmem>>, vector<128x128xf32>,
    } else {
    }
    return
  }
  func.func @transform_0(%arg0: i32, %arg1: i32) -> (i32, i32) {
    %c0_i32 = arith.constant 0 : i32
    %c0_i32_0 = arith.constant 0 : i32
    return %arg1, %c0_i32 : i32, i32
  }
  func.func @transform_1(%arg0: i32, %arg1: i32) -> (i32, i32) {
    %c0_i32 = arith.constant 0 : i32
    return %arg0, %arg1 : i32, i32
  }
  func.func @transform_2(%arg0: i32, %arg1: i32) -> (i32, i32) {
    %c0_i32 = arith.constant 0 : i32
    %c0_i32_0 = arith.constant 0 : i32
    %c0_i32_1 = arith.constant 0 : i32
    return %c0_i32, %c0_i32_0 : i32, i32
  }
  func.func @transform_3(%arg0: i32, %arg1: i32) -> (i32, i32) {
    %c0_i32 = arith.constant 0 : i32
    %c0_i32_0 = arith.constant 0 : i32
    %c0_i32_1 = arith.constant 0 : i32
    return %c0_i32, %c0_i32_0 : i32, i32
  }
  func.func @transform_4(%arg0: i32, %arg1: i32) -> (i32, i32) {
    %c0_i32 = arith.constant 0 : i32
    %c0_i32_0 = arith.constant 0 : i32
    return %arg0, %c0_i32 : i32, i32
  }
}

</mosaic_0001>

<llo_original>
// kernel: tpu_custom_call.1
$region0: #{tpu_custom_call.1}
  #allocation0 [shape = 'u32[]', space=smem, size = 0x4, offset = 0x4, fixed_abs, tag = 'smem constant byte address 0x4 - core index']
  #allocation1 [shape = 'u32[144,128]{1,0:T(1,128)}', space=vmem, size = 0x12000, scoped, tag = 'internal scratch']
  #allocation2 [shape = 'f32[128,128]{1,0:T(8,128)}', space=vmem, size = 0x10000, scoped, tag = 'scratch operand']
  %s0 = inlined_call_operand.hbm [shape: f32[128,128], index: 0, kind: input, shape index: {}]
  %s1 = inlined_call_operand.hbm [shape: f32[128,128], index: 1, kind: input, shape index: {}]
  %s2 = inlined_call_operand.hbm [shape: f32[128,128], index: 2, kind: input, shape index: {}]
  %s3 = inlined_call_operand.vmem [shape: f32[1,128], index: 3, kind: input, shape index: {}]
  %s4 = inlined_call_operand.hbm [shape: f32[128,128], index: 4, kind: output, shape index: {}]
  %s5 = sld [smem:[#allocation0]]
  $region46: #{tpu_custom_call.1} parent=0
    _
  %s7 = ssub.s32 1, %s5
  %s8 = scalar_select 0, %s7, %s5
  $region1: #{tpu_custom_call.1} parent=0
    #allocation3 [shape = 'u8[65536]{0}', space=vmem, size = 0x10000, scoped, tag = 'input window, operand 0, single buffered']
    #allocation4 [shape = 's32[1]{0}', space=sflag, size = 0x4, scoped, tag = 'scoped memory for tpu_custom_call.1']
    #allocation5 [shape = 's32[1]{0}', space=sflag, size = 0x4, scoped, tag = 'scoped memory for tpu_custom_call.1']
    #allocation6 [shape = 'u8[65536]{0}', space=vmem, size = 0x10000, scoped, tag = 'input window, operand 1, single buffered']
    #allocation7 [shape = 's32[1]{0}', space=sflag, size = 0x4, scoped, tag = 'scoped memory for tpu_custom_call.1']
    #allocation8 [shape = 'u8[65536]{0}', space=vmem, size = 0x10000, scoped, tag = 'input window, operand 2, single buffered']
    #allocation9 [shape = 'u8[65536]{0}', space=vmem, size = 0x10000, scoped, tag = 'output window, operand 0, single buffered']
    %9 = vsyncpa [#allocation4], 0
    %10 = vsyncpa [#allocation7], 0
    %11 = vsyncpa [#allocation5], 0
    // Predicated region
    $region2: #{tpu_custom_call.1} parent=1 // pred_check
      _
    $region3: #{tpu_custom_call.1} parent=1 // pred_check_branch
      %13 = sbr.rel (0) target = $region5
    $region4: #{tpu_custom_call.1} parent=1 // pred_region
      %s15 = ssub.s32 2048, 2048
      %16 = vsyncadd [#allocation4], %s15
      %s17 = sshll.u32 [#allocation3], 4
      %s18 = int_to_ptr.vmem [resolvable:$true] %s17
      %23 = dma.hbm_to_vmem [thread:$0]  %s0, 2048, %s18, [#allocation4], 128, 128, 8
    $region5: #{tpu_custom_call.1} parent=1 // pred_fallthru
      _
    // Predicated region
    $region6: #{tpu_custom_call.1} parent=1 // pred_check
      _
    $region7: #{tpu_custom_call.1} parent=1 // pred_check_branch
      %25 = sbr.rel (0) target = $region9
    $region8: #{tpu_custom_call.1} parent=1 // pred_region
      %s27 = ssub.s32 2048, 2048
      %28 = vsyncadd [#allocation7], %s27
      %s29 = sshll.u32 [#allocation6], 4
      %s30 = int_to_ptr.vmem [resolvable:$true] %s29
      %35 = dma.hbm_to_vmem [thread:$0]  %s1, 2048, %s30, [#allocation7], 128, 128, 8
    $region9: #{tpu_custom_call.1} parent=1 // pred_fallthru
      _
    // Predicated region
    $region10: #{tpu_custom_call.1} parent=1 // pred_check
      _
    $region11: #{tpu_custom_call.1} parent=1 // pred_check_branch
      %37 = sbr.rel (0) target = $region13
    $region12: #{tpu_custom_call.1} parent=1 // pred_region
      %s39 = ssub.s32 2048, 2048
      %40 = vsyncadd [#allocation7], %s39
      %s41 = sshll.u32 [#allocation8], 4
      %s42 = int_to_ptr.vmem [resolvable:$true] %s41
      %47 = dma.hbm_to_vmem [thread:$0]  %s2, 2048, %s42, [#allocation7], 128, 128, 8
    $region13: #{tpu_custom_call.1} parent=1 // pred_fallthru
      _
    // Predicated region
    $region14: #{tpu_custom_call.1} parent=1 // pred_check
      _
    $region15: #{tpu_custom_call.1} parent=1 // pred_check_branch
      %49 = sbr.rel (0) target = $region17
    $region16: #{tpu_custom_call.1} parent=1 // pred_region
      _
    $region17: #{tpu_custom_call.1} parent=1 // pred_fallthru
      _
    // Predicated region
    $region18: #{tpu_custom_call.1} parent=1 // pred_check
      _
    $region19: #{tpu_custom_call.1} parent=1 // pred_check_branch
      %51 = sbr.rel (0) target = $region21
    $region20: #{tpu_custom_call.1} parent=1 // pred_region
      %52 = dma.done [#allocation4], 2048
    $region21: #{tpu_custom_call.1} parent=1 // pred_fallthru
      _
    // Predicated region
    $region22: #{tpu_custom_call.1} parent=1 // pred_check
      _
    $region23: #{tpu_custom_call.1} parent=1 // pred_check_branch
      %54 = sbr.rel (0) target = $region25
    $region24: #{tpu_custom_call.1} parent=1 // pred_region
      %55 = dma.done [#allocation7], 2048
    $region25: #{tpu_custom_call.1} parent=1 // pred_fallthru
      _
    // Predicated region
    $region26: #{tpu_custom_call.1} parent=1 // pred_check
      _
    $region27: #{tpu_custom_call.1} parent=1 // pred_check_branch
      %57 = sbr.rel (0) target = $region29
    $region28: #{tpu_custom_call.1} parent=1 // pred_region
      %58 = dma.done [#allocation7], 2048
    $region29: #{tpu_custom_call.1} parent=1 // pred_fallthru
      _
    %p59 = scmp.eq.s32.totalorder 0, 0
    // Predicated region
    $region30: #{tpu_custom_call.1} parent=1 // pred_check
      %p60 = pneg %p59
    $region31: #{tpu_custom_call.1} parent=1 // pred_check_branch
      %62 = sbr.rel (%p60) target = $region33
    $region32: #{tpu_custom_call.1} parent=1 // pred_region
      %63 = vst [vmem:[#allocation2] sm:$0xff] 0.0
      %64 = vst [vmem:[#allocation2 + $0x8] sm:$0xff] 0.0
      %65 = vst [vmem:[#allocation2 + $0x10] sm:$0xff] 0.0
      %66 = vst [vmem:[#allocation2 + $0x18] sm:$0xff] 0.0
      %67 = vst [vmem:[#allocation2 + $0x20] sm:$0xff] 0.0
      %68 = vst [vmem:[#allocation2 + $0x28] sm:$0xff] 0.0
      %69 = vst [vmem:[#allocation2 + $0x30] sm:$0xff] 0.0
      %70 = vst [vmem:[#allocation2 + $0x38] sm:$0xff] 0.0
      %71 = vst [vmem:[#allocation2 + $0x40] sm:$0xff] 0.0
      %72 = vst [vmem:[#allocation2 + $0x48] sm:$0xff] 0.0
      %73 = vst [vmem:[#allocation2 + $0x50] sm:$0xff] 0.0
      %74 = vst [vmem:[#allocation2 + $0x58] sm:$0xff] 0.0
      %75 = vst [vmem:[#allocation2 + $0x60] sm:$0xff] 0.0
      %76 = vst [vmem:[#allocation2 + $0x68] sm:$0xff] 0.0
      %77 = vst [vmem:[#allocation2 + $0x70] sm:$0xff] 0.0
      %78 = vst [vmem:[#allocation2 + $0x78] sm:$0xff] 0.0
    $region33: #{tpu_custom_call.1} parent=1 // pred_fallthru
      _
    %v79 = vld [vmem:[#allocation3] sm:$0xff]
    %v80 = vld [vmem:[#allocation3 + $0x8] sm:$0xff]
    %v81 = vld [vmem:[#allocation3 + $0x10] sm:$0xff]
    %v82 = vld [vmem:[#allocation3 + $0x18] sm:$0xff]
    %v83 = vld [vmem:[#allocation3 + $0x20] sm:$0xff]
    %v84 = vld [vmem:[#allocation3 + $0x28] sm:$0xff]
    %v85 = vld [vmem:[#allocation3 + $0x30] sm:$0xff]
    %v86 = vld [vmem:[#allocation3 + $0x38] sm:$0xff]
    %v87 = vld [vmem:[#allocation3 + $0x40] sm:$0xff]
    %v88 = vld [vmem:[#allocation3 + $0x48] sm:$0xff]
    %v89 = vld [vmem:[#allocation3 + $0x50] sm:$0xff]
    %v90 = vld [vmem:[#allocation3 + $0x58] sm:$0xff]
    %v91 = vld [vmem:[#allocation3 + $0x60] sm:$0xff]
    %v92 = vld [vmem:[#allocation3 + $0x68] sm:$0xff]
    %v93 = vld [vmem:[#allocation3 + $0x70] sm:$0xff]
    %v94 = vld [vmem:[#allocation3 + $0x78] sm:$0xff]
    %v95 = vld [vmem:[#allocation8] sm:$0xff]
    %v96 = vld [vmem:[#allocation8 + $0x8] sm:$0xff]
    %v97 = vld [vmem:[#allocation8 + $0x10] sm:$0xff]
    %v98 = vld [vmem:[#allocation8 + $0x18] sm:$0xff]
    %v99 = vld [vmem:[#allocation8 + $0x20] sm:$0xff]
    %v100 = vld [vmem:[#allocation8 + $0x28] sm:$0xff]
    %v101 = vld [vmem:[#allocation8 + $0x30] sm:$0xff]
    %v102 = vld [vmem:[#allocation8 + $0x38] sm:$0xff]
    %v103 = vld [vmem:[#allocation8 + $0x40] sm:$0xff]
    %v104 = vld [vmem:[#allocation8 + $0x48] sm:$0xff]
    %v105 = vld [vmem:[#allocation8 + $0x50] sm:$0xff]
    %v106 = vld [vmem:[#allocation8 + $0x58] sm:$0xff]
    %v107 = vld [vmem:[#allocation8 + $0x60] sm:$0xff]
    %v108 = vld [vmem:[#allocation8 + $0x68] sm:$0xff]
    %v109 = vld [vmem:[#allocation8 + $0x70] sm:$0xff]
    %v110 = vld [vmem:[#allocation8 + $0x78] sm:$0xff]
    %111 = vmatprep.subr.mxu0 0.0
    %112 = vmatpush1.msra.mxu0 %v110
    %113 = vmatprep.subr.mxu0 0.0
    %114 = vmatpush1.msra.mxu0 %v109
    %115 = vmatprep.subr.mxu0 0.0
    %116 = vmatpush1.msra.mxu0 %v108
    %117 = vmatprep.subr.mxu0 0.0
    %118 = vmatpush1.msra.mxu0 %v107
    %119 = vmatprep.subr.mxu0 0.0
    %120 = vmatpush1.msra.mxu0 %v106
    %121 = vmatprep.subr.mxu0 0.0
    %122 = vmatpush1.msra.mxu0 %v105
    %123 = vmatprep.subr.mxu0 0.0
    %124 = vmatpush1.msra.mxu0 %v104
    %125 = vmatprep.subr.mxu0 0.0
    %126 = vmatpush1.msra.mxu0 %v103
    %127 = vmatprep.subr.mxu0 0.0
    %128 = vmatpush1.msra.mxu0 %v102
    %129 = vmatprep.subr.mxu0 0.0
    %130 = vmatpush1.msra.mxu0 %v101
    %131 = vmatprep.subr.mxu0 0.0
    %132 = vmatpush1.msra.mxu0 %v100
    %133 = vmatprep.subr.mxu0 0.0
    %134 = vmatpush1.msra.mxu0 %v99
    %135 = vmatprep.subr.mxu0 0.0
    %136 = vmatpush1.msra.mxu0 %v98
    %137 = vmatprep.subr.mxu0 0.0
    %138 = vmatpush1.msra.mxu0 %v97
    %139 = vmatprep.subr.mxu0 0.0
    %140 = vmatpush1.msra.mxu0 %v96
    %141 = vmatprep.subr.mxu0 0.0
    %142 = vmatpush1.msra.mxu0 %v95
    %143 = vmatprep.subr.mxu0 0.0
    %144 = vmatpush2.msra.mxu0 0.0
    %145 = vmatprep.subr.mxu0 0.0
    %146 = vmatpush2.msra.mxu0 0.0
    %147 = vmatprep.subr.mxu0 0.0
    %148 = vmatpush2.msra.mxu0 0.0
    %149 = vmatprep.subr.mxu0 0.0
    %150 = vmatpush2.msra.mxu0 0.0
    %151 = vmatprep.subr.mxu0 0.0
    %152 = vmatpush2.msra.mxu0 0.0
    %153 = vmatprep.subr.mxu0 0.0
    %154 = vmatpush2.msra.mxu0 0.0
    %155 = vmatprep.subr.mxu0 0.0
    %156 = vmatpush2.msra.mxu0 0.0
    %157 = vmatprep.subr.mxu0 0.0
    %158 = vmatpush2.msra.mxu0 0.0
    %159 = vmatprep.subr.mxu0 0.0
    %160 = vmatpush2.msra.mxu0 0.0
    %161 = vmatprep.subr.mxu0 0.0
    %162 = vmatpush2.msra.mxu0 0.0
    %163 = vmatprep.subr.mxu0 0.0
    %164 = vmatpush2.msra.mxu0 0.0
    %165 = vmatprep.subr.mxu0 0.0
    %166 = vmatpush2.msra.mxu0 0.0
    %167 = vmatprep.subr.mxu0 0.0
    %168 = vmatpush2.msra.mxu0 0.0
    %169 = vmatprep.subr.mxu0 0.0
    %170 = vmatpush2.msra.mxu0 0.0
    %171 = vmatprep.subr.mxu0 0.0
    %172 = vmatpush2.msra.mxu0 0.0
    %173 = vmatprep.subr.mxu0 0.0
    %174 = vmatpush2.msra.mxu0 0.0
    %175 = vmatprep.mubr.f32.mxu0 0.0
    %176 = vmatmul.mubr.f32.gmra.mxu0 %v79
    %v177 = vpop.f32.mrf.mxu0
    %v178 = vadd.f32 0.0, %v177
    %v179 = vpop.f32.mrf.mxu0
    %180 = vmatprep.mubr.f32.mxu0 0.0
    %181 = vmatmul.mubr.f32.gmra.mxu0 %v80
    %v182 = vpop.f32.mrf.mxu0
    %v183 = vadd.f32 0.0, %v182
    %v184 = vpop.f32.mrf.mxu0
    %185 = vmatprep.mubr.f32.mxu0 0.0
    %186 = vmatmul.mubr.f32.gmra.mxu0 %v81
    %v187 = vpop.f32.mrf.mxu0
    %v188 = vadd.f32 0.0, %v187
    %v189 = vpop.f32.mrf.mxu0
    %190 = vmatprep.mubr.f32.mxu0 0.0
    %191 = vmatmul.mubr.f32.gmra.mxu0 %v82
    %v192 = vpop.f32.mrf.mxu0
    %v193 = vadd.f32 0.0, %v192
    %v194 = vpop.f32.mrf.mxu0
    %195 = vmatprep.mubr.f32.mxu0 0.0
    %196 = vmatmul.mubr.f32.gmra.mxu0 %v83
    %v197 = vpop.f32.mrf.mxu0
    %v198 = vadd.f32 0.0, %v197
    %v199 = vpop.f32.mrf.mxu0
    %200 = vmatprep.mubr.f32.mxu0 0.0
    %201 = vmatmul.mubr.f32.gmra.mxu0 %v84
    %v202 = vpop.f32.mrf.mxu0
    %v203 = vadd.f32 0.0, %v202
    %v204 = vpop.f32.mrf.mxu0
    %205 = vmatprep.mubr.f32.mxu0 0.0
    %206 = vmatmul.mubr.f32.gmra.mxu0 %v85
    %v207 = vpop.f32.mrf.mxu0
    %v208 = vadd.f32 0.0, %v207
    %v209 = vpop.f32.mrf.mxu0
    %210 = vmatprep.mubr.f32.mxu0 0.0
    %211 = vmatmul.mubr.f32.gmra.mxu0 %v86
    %v212 = vpop.f32.mrf.mxu0
    %v213 = vadd.f32 0.0, %v212
    %v214 = vpop.f32.mrf.mxu0
    %215 = vmatprep.mubr.f32.mxu0 0.0
    %216 = vmatmul.mubr.f32.gmra.mxu0 %v87
    %v217 = vpop.f32.mrf.mxu0
    %v218 = vadd.f32 0.0, %v217
    %v219 = vpop.f32.mrf.mxu0
    %220 = vmatprep.mubr.f32.mxu0 0.0
    %221 = vmatmul.mubr.f32.gmra.mxu0 %v88
    %v222 = vpop.f32.mrf.mxu0
    %v223 = vadd.f32 0.0, %v222
    %v224 = vpop.f32.mrf.mxu0
    %225 = vmatprep.mubr.f32.mxu0 0.0
    %226 = vmatmul.mubr.f32.gmra.mxu0 %v89
    %v227 = vpop.f32.mrf.mxu0
    %v228 = vadd.f32 0.0, %v227
    %v229 = vpop.f32.mrf.mxu0
    %230 = vmatprep.mubr.f32.mxu0 0.0
    %231 = vmatmul.mubr.f32.gmra.mxu0 %v90
    %v232 = vpop.f32.mrf.mxu0
    %v233 = vadd.f32 0.0, %v232
    %v234 = vpop.f32.mrf.mxu0
    %235 = vmatprep.mubr.f32.mxu0 0.0
    %236 = vmatmul.mubr.f32.gmra.mxu0 %v91
    %v237 = vpop.f32.mrf.mxu0
    %v238 = vadd.f32 0.0, %v237
    %v239 = vpop.f32.mrf.mxu0
    %240 = vmatprep.mubr.f32.mxu0 0.0
    %241 = vmatmul.mubr.f32.gmra.mxu0 %v92
    %v242 = vpop.f32.mrf.mxu0
    %v243 = vadd.f32 0.0, %v242
    %v244 = vpop.f32.mrf.mxu0
    %245 = vmatprep.mubr.f32.mxu0 0.0
    %246 = vmatmul.mubr.f32.gmra.mxu0 %v93
    %v247 = vpop.f32.mrf.mxu0
    %v248 = vadd.f32 0.0, %v247
    %v249 = vpop.f32.mrf.mxu0
    %250 = vmatprep.mubr.f32.mxu0 0.0
    %251 = vmatmul.mubr.f32.gmra.mxu0 %v94
    %v252 = vpop.f32.mrf.mxu0
    %v253 = vadd.f32 0.0, %v252
    %v254 = vpop.f32.mrf.mxu0
    %255 = vdwg.mxu0
    %v256 = vld [vmem:[#allocation2] sm:$0xff]
    %v257 = vld [vmem:[#allocation2 + $0x8] sm:$0xff]
    %v258 = vld [vmem:[#allocation2 + $0x10] sm:$0xff]
    %v259 = vld [vmem:[#allocation2 + $0x18] sm:$0xff]
    %v260 = vld [vmem:[#allocation2 + $0x20] sm:$0xff]
    %v261 = vld [vmem:[#allocation2 + $0x28] sm:$0xff]
    %v262 = vld [vmem:[#allocation2 + $0x30] sm:$0xff]
    %v263 = vld [vmem:[#allocation2 + $0x38] sm:$0xff]
    %v264 = vld [vmem:[#allocation2 + $0x40] sm:$0xff]
    %v265 = vld [vmem:[#allocation2 + $0x48] sm:$0xff]
    %v266 = vld [vmem:[#allocation2 + $0x50] sm:$0xff]
    %v267 = vld [vmem:[#allocation2 + $0x58] sm:$0xff]
    %v268 = vld [vmem:[#allocation2 + $0x60] sm:$0xff]
    %v269 = vld [vmem:[#allocation2 + $0x68] sm:$0xff]
    %v270 = vld [vmem:[#allocation2 + $0x70] sm:$0xff]
    %v271 = vld [vmem:[#allocation2 + $0x78] sm:$0xff]
    %v272 = vld [vmem:[#allocation6] sm:$0xff]
    %v273 = vld [vmem:[#allocation6 + $0x8] sm:$0xff]
    %v274 = vld [vmem:[#allocation6 + $0x10] sm:$0xff]
    %v275 = vld [vmem:[#allocation6 + $0x18] sm:$0xff]
    %v276 = vld [vmem:[#allocation6 + $0x20] sm:$0xff]
    %v277 = vld [vmem:[#allocation6 + $0x28] sm:$0xff]
    %v278 = vld [vmem:[#allocation6 + $0x30] sm:$0xff]
    %v279 = vld [vmem:[#allocation6 + $0x38] sm:$0xff]
    %v280 = vld [vmem:[#allocation6 + $0x40] sm:$0xff]
    %v281 = vld [vmem:[#allocation6 + $0x48] sm:$0xff]
    %v282 = vld [vmem:[#allocation6 + $0x50] sm:$0xff]
    %v283 = vld [vmem:[#allocation6 + $0x58] sm:$0xff]
    %v284 = vld [vmem:[#allocation6 + $0x60] sm:$0xff]
    %v285 = vld [vmem:[#allocation6 + $0x68] sm:$0xff]
    %v286 = vld [vmem:[#allocation6 + $0x70] sm:$0xff]
    %v287 = vld [vmem:[#allocation6 + $0x78] sm:$0xff]
    %288 = vmatprep.subr.mxu0 0.0
    %289 = vmatpush1.msra.mxu0 %v253
    %290 = vmatprep.subr.mxu0 0.0
    %291 = vmatpush1.msra.mxu0 %v248
    %292 = vmatprep.subr.mxu0 0.0
    %293 = vmatpush1.msra.mxu0 %v243
    %294 = vmatprep.subr.mxu0 0.0
    %295 = vmatpush1.msra.mxu0 %v238
    %296 = vmatprep.subr.mxu0 0.0
    %297 = vmatpush1.msra.mxu0 %v233
    %298 = vmatprep.subr.mxu0 0.0
    %299 = vmatpush1.msra.mxu0 %v228
    %300 = vmatprep.subr.mxu0 0.0
    %301 = vmatpush1.msra.mxu0 %v223
    %302 = vmatprep.subr.mxu0 0.0
    %303 = vmatpush1.msra.mxu0 %v218
    %304 = vmatprep.subr.mxu0 0.0
    %305 = vmatpush1.msra.mxu0 %v213
    %306 = vmatprep.subr.mxu0 0.0
    %307 = vmatpush1.msra.mxu0 %v208
    %308 = vmatprep.subr.mxu0 0.0
    %309 = vmatpush1.msra.mxu0 %v203
    %310 = vmatprep.subr.mxu0 0.0
    %311 = vmatpush1.msra.mxu0 %v198
    %312 = vmatprep.subr.mxu0 0.0
    %313 = vmatpush1.msra.mxu0 %v193
    %314 = vmatprep.subr.mxu0 0.0
    %315 = vmatpush1.msra.mxu0 %v188
    %316 = vmatprep.subr.mxu0 0.0
    %317 = vmatpush1.msra.mxu0 %v183
    %318 = vmatprep.subr.mxu0 0.0
    %319 = vmatpush1.msra.mxu0 %v178
    %320 = vmatprep.subr.mxu0 0.0
    %321 = vmatpush2.msra.mxu0 0.0
    %322 = vmatprep.subr.mxu0 0.0
    %323 = vmatpush2.msra.mxu0 0.0
    %324 = vmatprep.subr.mxu0 0.0
    %325 = vmatpush2.msra.mxu0 0.0
    %326 = vmatprep.subr.mxu0 0.0
    %327 = vmatpush2.msra.mxu0 0.0
    %328 = vmatprep.subr.mxu0 0.0
    %329 = vmatpush2.msra.mxu0 0.0
    %330 = vmatprep.subr.mxu0 0.0
    %331 = vmatpush2.msra.mxu0 0.0
    %332 = vmatprep.subr.mxu0 0.0
    %333 = vmatpush2.msra.mxu0 0.0
    %334 = vmatprep.subr.mxu0 0.0
    %335 = vmatpush2.msra.mxu0 0.0
    %336 = vmatprep.subr.mxu0 0.0
    %337 = vmatpush2.msra.mxu0 0.0
    %338 = vmatprep.subr.mxu0 0.0
    %339 = vmatpush2.msra.mxu0 0.0
    %340 = vmatprep.subr.mxu0 0.0
    %341 = vmatpush2.msra.mxu0 0.0
    %342 = vmatprep.subr.mxu0 0.0
    %343 = vmatpush2.msra.mxu0 0.0
    %344 = vmatprep.subr.mxu0 0.0
    %345 = vmatpush2.msra.mxu0 0.0
    %346 = vmatprep.subr.mxu0 0.0
    %347 = vmatpush2.msra.mxu0 0.0
    %348 = vmatprep.subr.mxu0 0.0
    %349 = vmatpush2.msra.mxu0 0.0
    %350 = vmatprep.subr.mxu0 0.0
    %351 = vmatpush2.msra.mxu0 0.0
    %352 = vmatprep.mubr.f32.mxu0 0.0
    %353 = vmatmul.mubr.f32.gmra.mxu0 %v272
    %v354 = vpop.f32.mrf.mxu0
    %v355 = vadd.f32 0.0, %v354
    %v356 = vpop.f32.mrf.mxu0
    %357 = vmatprep.mubr.f32.mxu0 0.0
    %358 = vmatmul.mubr.f32.gmra.mxu0 %v273
    %v359 = vpop.f32.mrf.mxu0
    %v360 = vadd.f32 0.0, %v359
    %v361 = vpop.f32.mrf.mxu0
    %362 = vmatprep.mubr.f32.mxu0 0.0
    %363 = vmatmul.mubr.f32.gmra.mxu0 %v274
    %v364 = vpop.f32.mrf.mxu0
    %v365 = vadd.f32 0.0, %v364
    %v366 = vpop.f32.mrf.mxu0
    %367 = vmatprep.mubr.f32.mxu0 0.0
    %368 = vmatmul.mubr.f32.gmra.mxu0 %v275
    %v369 = vpop.f32.mrf.mxu0
    %v370 = vadd.f32 0.0, %v369
    %v371 = vpop.f32.mrf.mxu0
    %372 = vmatprep.mubr.f32.mxu0 0.0
    %373 = vmatmul.mubr.f32.gmra.mxu0 %v276
    %v374 = vpop.f32.mrf.mxu0
    %v375 = vadd.f32 0.0, %v374
    %v376 = vpop.f32.mrf.mxu0
    %377 = vmatprep.mubr.f32.mxu0 0.0
    %378 = vmatmul.mubr.f32.gmra.mxu0 %v277
    %v379 = vpop.f32.mrf.mxu0
    %v380 = vadd.f32 0.0, %v379
    %v381 = vpop.f32.mrf.mxu0
    %382 = vmatprep.mubr.f32.mxu0 0.0
    %383 = vmatmul.mubr.f32.gmra.mxu0 %v278
    %v384 = vpop.f32.mrf.mxu0
    %v385 = vadd.f32 0.0, %v384
    %v386 = vpop.f32.mrf.mxu0
    %387 = vmatprep.mubr.f32.mxu0 0.0
    %388 = vmatmul.mubr.f32.gmra.mxu0 %v279
    %v389 = vpop.f32.mrf.mxu0
    %v390 = vadd.f32 0.0, %v389
    %v391 = vpop.f32.mrf.mxu0
    %392 = vmatprep.mubr.f32.mxu0 0.0
    %393 = vmatmul.mubr.f32.gmra.mxu0 %v280
    %v394 = vpop.f32.mrf.mxu0
    %v395 = vadd.f32 0.0, %v394
    %v396 = vpop.f32.mrf.mxu0
    %397 = vmatprep.mubr.f32.mxu0 0.0
    %398 = vmatmul.mubr.f32.gmra.mxu0 %v281
    %v399 = vpop.f32.mrf.mxu0
    %v400 = vadd.f32 0.0, %v399
    %v401 = vpop.f32.mrf.mxu0
    %402 = vmatprep.mubr.f32.mxu0 0.0
    %403 = vmatmul.mubr.f32.gmra.mxu0 %v282
    %v404 = vpop.f32.mrf.mxu0
    %v405 = vadd.f32 0.0, %v404
    %v406 = vpop.f32.mrf.mxu0
    %407 = vmatprep.mubr.f32.mxu0 0.0
    %408 = vmatmul.mubr.f32.gmra.mxu0 %v283
    %v409 = vpop.f32.mrf.mxu0
    %v410 = vadd.f32 0.0, %v409
    %v411 = vpop.f32.mrf.mxu0
    %412 = vmatprep.mubr.f32.mxu0 0.0
    %413 = vmatmul.mubr.f32.gmra.mxu0 %v284
    %v414 = vpop.f32.mrf.mxu0
    %v415 = vadd.f32 0.0, %v414
    %v416 = vpop.f32.mrf.mxu0
    %417 = vmatprep.mubr.f32.mxu0 0.0
    %418 = vmatmul.mubr.f32.gmra.mxu0 %v285
    %v419 = vpop.f32.mrf.mxu0
    %v420 = vadd.f32 0.0, %v419
    %v421 = vpop.f32.mrf.mxu0
    %422 = vmatprep.mubr.f32.mxu0 0.0
    %423 = vmatmul.mubr.f32.gmra.mxu0 %v286
    %v424 = vpop.f32.mrf.mxu0
    %v425 = vadd.f32 0.0, %v424
    %v426 = vpop.f32.mrf.mxu0
    %427 = vmatprep.mubr.f32.mxu0 0.0
    %428 = vmatmul.mubr.f32.gmra.mxu0 %v287
    %v429 = vpop.f32.mrf.mxu0
    %v430 = vadd.f32 0.0, %v429
    %v431 = vpop.f32.mrf.mxu0
    %432 = vdwg.mxu0
    %v433 = vadd.f32 %v256, %v355
    %v434 = vadd.f32 %v257, %v360
    %v435 = vadd.f32 %v258, %v365
    %v436 = vadd.f32 %v259, %v370
    %v437 = vadd.f32 %v260, %v375
    %v438 = vadd.f32 %v261, %v380
    %v439 = vadd.f32 %v262, %v385
    %v440 = vadd.f32 %v263, %v390
    %v441 = vadd.f32 %v264, %v395
    %v442 = vadd.f32 %v265, %v400
    %v443 = vadd.f32 %v266, %v405
    %v444 = vadd.f32 %v267, %v410
    %v445 = vadd.f32 %v268, %v415
    %v446 = vadd.f32 %v269, %v420
    %v447 = vadd.f32 %v270, %v425
    %v448 = vadd.f32 %v271, %v430
    %449 = vst [vmem:[#allocation2] sm:$0xff] %v433
    %450 = vst [vmem:[#allocation2 + $0x8] sm:$0xff] %v434
    %451 = vst [vmem:[#allocation2 + $0x10] sm:$0xff] %v435
    %452 = vst [vmem:[#allocation2 + $0x18] sm:$0xff] %v436
    %453 = vst [vmem:[#allocation2 + $0x20] sm:$0xff] %v437
    %454 = vst [vmem:[#allocation2 + $0x28] sm:$0xff] %v438
    %455 = vst [vmem:[#allocation2 + $0x30] sm:$0xff] %v439
    %456 = vst [vmem:[#allocation2 + $0x38] sm:$0xff] %v440
    %457 = vst [vmem:[#allocation2 + $0x40] sm:$0xff] %v441
    %458 = vst [vmem:[#allocation2 + $0x48] sm:$0xff] %v442
    %459 = vst [vmem:[#allocation2 + $0x50] sm:$0xff] %v443
    %460 = vst [vmem:[#allocation2 + $0x58] sm:$0xff] %v444
    %461 = vst [vmem:[#allocation2 + $0x60] sm:$0xff] %v445
    %462 = vst [vmem:[#allocation2 + $0x68] sm:$0xff] %v446
    %463 = vst [vmem:[#allocation2 + $0x70] sm:$0xff] %v447
    %464 = vst [vmem:[#allocation2 + $0x78] sm:$0xff] %v448
    // Predicated region
    $region34: #{tpu_custom_call.1} parent=1 // pred_check
      %p465 = pneg %p59
    $region35: #{tpu_custom_call.1} parent=1 // pred_check_branch
      %467 = sbr.rel (%p465) target = $region37
    $region36: #{tpu_custom_call.1} parent=1 // pred_region
      %v468 = vld [vmem:[#allocation2] sm:$0xff]
      %v469 = vld [vmem:[#allocation2 + $0x8] sm:$0xff]
      %v470 = vld [vmem:[#allocation2 + $0x10] sm:$0xff]
      %v471 = vld [vmem:[#allocation2 + $0x18] sm:$0xff]
      %v472 = vld [vmem:[#allocation2 + $0x20] sm:$0xff]
      %v473 = vld [vmem:[#allocation2 + $0x28] sm:$0xff]
      %v474 = vld [vmem:[#allocation2 + $0x30] sm:$0xff]
      %v475 = vld [vmem:[#allocation2 + $0x38] sm:$0xff]
      %v476 = vld [vmem:[#allocation2 + $0x40] sm:$0xff]
      %v477 = vld [vmem:[#allocation2 + $0x48] sm:$0xff]
      %v478 = vld [vmem:[#allocation2 + $0x50] sm:$0xff]
      %v479 = vld [vmem:[#allocation2 + $0x58] sm:$0xff]
      %v480 = vld [vmem:[#allocation2 + $0x60] sm:$0xff]
      %v481 = vld [vmem:[#allocation2 + $0x68] sm:$0xff]
      %v482 = vld [vmem:[#allocation2 + $0x70] sm:$0xff]
      %v483 = vld [vmem:[#allocation2 + $0x78] sm:$0xff]
      %v484 = vld [vmem:[%s3] sm:$0x1]
      %v486 = vlaneseq
      %v487 = vshrl.u32 %v486, 7
      %v488 = vsub.s32 0, %v487
      %v489 = vrot.slane %v484, %v488
      %v491 = vadd.f32 %v468, %v489
      %v492 = vadd.f32 %v469, %v489
      %v493 = vadd.f32 %v470, %v489
      %v494 = vadd.f32 %v471, %v489
      %v495 = vadd.f32 %v472, %v489
      %v496 = vadd.f32 %v473, %v489
      %v497 = vadd.f32 %v474, %v489
      %v498 = vadd.f32 %v475, %v489
      %v499 = vadd.f32 %v476, %v489
      %v500 = vadd.f32 %v477, %v489
      %v501 = vadd.f32 %v478, %v489
      %v502 = vadd.f32 %v479, %v489
      %v503 = vadd.f32 %v480, %v489
      %v504 = vadd.f32 %v481, %v489
      %v505 = vadd.f32 %v482, %v489
      %v506 = vadd.f32 %v483, %v489
      %507 = vst [vmem:[#allocation9] sm:$0xff] %v491
      %508 = vst [vmem:[#allocation9 + $0x8] sm:$0xff] %v492
      %509 = vst [vmem:[#allocation9 + $0x10] sm:$0xff] %v493
      %510 = vst [vmem:[#allocation9 + $0x18] sm:$0xff] %v494
      %511 = vst [vmem:[#allocation9 + $0x20] sm:$0xff] %v495
      %512 = vst [vmem:[#allocation9 + $0x28] sm:$0xff] %v496
      %513 = vst [vmem:[#allocation9 + $0x30] sm:$0xff] %v497
      %514 = vst [vmem:[#allocation9 + $0x38] sm:$0xff] %v498
      %515 = vst [vmem:[#allocation9 + $0x40] sm:$0xff] %v499
      %516 = vst [vmem:[#allocation9 + $0x48] sm:$0xff] %v500
      %517 = vst [vmem:[#allocation9 + $0x50] sm:$0xff] %v501
      %518 = vst [vmem:[#allocation9 + $0x58] sm:$0xff] %v502
      %519 = vst [vmem:[#allocation9 + $0x60] sm:$0xff] %v503
      %520 = vst [vmem:[#allocation9 + $0x68] sm:$0xff] %v504
      %521 = vst [vmem:[#allocation9 + $0x70] sm:$0xff] %v505
      %522 = vst [vmem:[#allocation9 + $0x78] sm:$0xff] %v506
    $region37: #{tpu_custom_call.1} parent=1 // pred_fallthru
      _
    // Predicated region
    $region38: #{tpu_custom_call.1} parent=1 // pred_check
      _
    $region39: #{tpu_custom_call.1} parent=1 // pred_check_branch
      %524 = sbr.rel (0) target = $region41
    $region40: #{tpu_custom_call.1} parent=1 // pred_region
      %s526 = ssub.s32 2048, 2048
      %527 = vsyncadd [#allocation5], %s526
      %s528 = sshll.u32 [#allocation9], 4
      %s529 = int_to_ptr.vmem [resolvable:$true] %s528
      %534 = dma.vmem_to_hbm [thread:$0]  %s529, 2048, %s4, [#allocation5], 128, 128, 8
    $region41: #{tpu_custom_call.1} parent=1 // pred_fallthru
      _
    // Predicated region
    $region42: #{tpu_custom_call.1} parent=1 // pred_check
      _
    $region43: #{tpu_custom_call.1} parent=1 // pred_check_branch
      %536 = sbr.rel (0) target = $region45
    $region44: #{tpu_custom_call.1} parent=1 // pred_region
      %537 = dma.done [#allocation5], 2048
    $region45: #{tpu_custom_call.1} parent=1 // pred_fallthru
      _
    %538 = vsyncpa [#allocation4], 1
    %539 = vsyncpa [#allocation7], 1
    %540 = vsyncpa [#allocation5], 1

</llo_original>
